<compile_context>
chip_gen: v5e
topology: v5e:2x2
jax: 0.10.0
libtpu: 0.0.40
codegen_flags: <defaults>
</compile_context>

<pallas_src>
import math

import jax
import jax.numpy as jnp
from jax.experimental import pallas as pl
from jax.experimental.pallas import tpu as pltpu

LANE = 128                              # vreg lane width
SUBLANE = 8                             # vreg sublane count (f32)
VMEM_BUDGET_BYTES = 32 * 1024 * 1024    # tile-sizing budget (safe on v7x 64 MiB/TC)
VMEM_LIMIT_BYTES = 48 * 1024 * 1024     # scoped-VMEM limit handed to Mosaic
MIN_BATCH_FOR_MEGACORE = 2048           # force >=2 grid steps above this batch


def _round_up(n, m):
    return ((n + m - 1) // m) * m


def _cdiv(a, b):
    return -(-a // b)


def _logreg_kernel(x_ref, wt_ref, b_ref, o_ref):
    # quant / dequant stubs are identities in float mode -> no-ops.
    x = x_ref[...]                                               # [TM, D]
    logits = jnp.dot(x, wt_ref[...],                             # MXU
                     preferred_element_type=jnp.float32) + b_ref[...]
    acts = jnp.maximum(logits, 0.0)                              # ReLU
    # Numerically-stable softmax over the last axis (F.softmax default dim=1
    # for 2-D input). No padded lanes exist, so no masking is required.
    m = jnp.max(acts, axis=-1, keepdims=True)
    e = jnp.exp(acts - m)
    denom = jnp.sum(e, axis=-1, keepdims=True)
    # approx reciprocal -> EUP slot, ~2^-12 rel error (fine for probabilities).
    o_ref[...] = (e * pl.reciprocal(denom, approx=True)).astype(o_ref.dtype)


def prepare_params(weight, bias):
    """One-time param prep (call at weight-load time, NOT per forward).

    weight: [O, D], bias: [O]  ->  wt: [D, O], b: [1, O]
    """
    out_dim, _ = weight.shape
    return weight.T, bias.reshape(1, out_dim)


def _choose_tiling(B, D, out_dim, itemsize):
    """Pick (TM, n_steps) from the VMEM budget + megacore considerations."""
    d_lanes = _round_up(D, LANE)
    o_lanes = _round_up(out_dim, LANE)
    # Double-buffered x + out tiles; VMEM layout is lane-padded to 128.
    per_row = 2 * (d_lanes + o_lanes) * itemsize
    # Resident weight/bias are still double-buffered by Pallas by default.
    resident = 2 * (_round_up(D, SUBLANE) + SUBLANE) * o_lanes * itemsize
    tm_max = max(SUBLANE,
                 ((VMEM_BUDGET_BYTES - resident) // per_row) // SUBLANE * SUBLANE)

    n_steps = _cdiv(B, tm_max)
    if n_steps == 1 and B >= MIN_BATCH_FOR_MEGACORE:
        n_steps = 2          # v7x: keep both TensorCores busy
    elif n_steps > 1 and n_steps % 2:
        n_steps += 1         # even step count shards evenly across 2 TCs
    tm = _round_up(_cdiv(B, n_steps), SUBLANE)   # <= tm_max, padding < 8*n_steps
    return tm, n_steps


@jax.jit
def logistic_regression_forward(x, wt, b):
    """x: [B, D] f32, wt: [D, O], b: [1, O] -> [B, O] softmax probabilities."""
    B, D = x.shape
    out_dim = wt.shape[1]
    itemsize = x.dtype.itemsize

    TM, n_steps = _choose_tiling(B, D, out_dim, itemsize)
    B_pad = TM * n_steps
    if B_pad != B:
        # Padding is < 8 rows per grid step by construction (cheap).
        x = jnp.zeros((B_pad, D), x.dtype).at[:B].set(x)

    cost = pl.CostEstimate(
        flops=2 * B_pad * D * out_dim,
        transcendentals=B_pad * out_dim,
        bytes_accessed=(B_pad * (D + out_dim) + D * out_dim + out_dim) * itemsize,
    )

    out = pl.pallas_call(
        _logreg_kernel,
        out_shape=jax.ShapeDtypeStruct((B_pad, out_dim), x.dtype),
        grid_spec=pl.GridSpec(
            grid=(n_steps,),
            in_specs=[
                pl.BlockSpec((TM, D), lambda i: (i, 0)),        # x: pipelined
                pl.BlockSpec((D, out_dim), lambda i: (0, 0)),   # weight: resident
                pl.BlockSpec((1, out_dim), lambda i: (0, 0)),   # bias: resident
            ],
            out_specs=pl.BlockSpec((TM, out_dim), lambda i: (i, 0)),
        ),
        compiler_params=pltpu.CompilerParams(
            dimension_semantics=("parallel",),
            vmem_limit_bytes=VMEM_LIMIT_BYTES,
        ),
        cost_estimate=cost,
    )(x, wt, b)

    return out if B_pad == B else out[:B]


def _reference(x, weight, bias):
    logits = x @ weight.T + bias
    acts = jnp.maximum(logits, 0.0)
    return jax.nn.softmax(acts, axis=-1)


if __name__ == "__main__":
    input_dim, output_dim = 32, 16
    batch = 8

    key = jax.random.PRNGKey(0)
    kx, kw, kb = jax.random.split(key, 3)

    x = jax.random.normal(kx, (batch, input_dim), dtype=jnp.float32)
    # Deterministic Linear params (mimicking nn.Linear's uniform init bounds).
    bound = 1.0 / math.sqrt(input_dim)
    weight = jax.random.uniform(kw, (output_dim, input_dim),
                                minval=-bound, maxval=bound, dtype=jnp.float32)
    bias = jax.random.uniform(kb, (output_dim,),
                              minval=-bound, maxval=bound, dtype=jnp.float32)

    # One-time weight prep (transpose), hoisted out of the forward pass.
    wt, b = prepare_params(weight, bias)

    out = jax.block_until_ready(logistic_regression_forward(x, wt, b))

    ref = _reference(x, weight, bias)
    assert out.shape == (batch, output_dim)
    # approx reciprocal -> ~2^-12 rel error; loosen tolerance accordingly.
    assert jnp.allclose(out, ref, atol=1e-3, rtol=1e-3), "mismatch vs reference"

    print("KERNEL_OK")
</pallas_src>

<mosaic_0001>
module attributes {stable_mosaic.version = 11 : i64} {
  func.func @_logreg_kernel(%arg0: i32, %arg1: memref<8x32xf32, #tpu.memory_space<vmem>>, %arg2: memref<32x16xf32, #tpu.memory_space<vmem>>, %arg3: memref<1x16xf32, #tpu.memory_space<vmem>>, %arg4: memref<8x16xf32, #tpu.memory_space<vmem>>) attributes {dimension_semantics = [#tpu.dimension_semantics<parallel>], iteration_bounds = array<i64: 1>, scalar_prefetch = 0 : i64, scratch_operands = 0 : i64, tpu.core_type = #tpu.core_type<tc>, window_params = [{transform_indices = @transform_0, window_bounds = array<i64: 8, 32>}, {pipeline_mode = #tpu.pipeline_mode<synchronous>, transform_indices = @transform_1, window_bounds = array<i64: 32, 16>}, {pipeline_mode = #tpu.pipeline_mode<synchronous>, transform_indices = @transform_2, window_bounds = array<i64: 1, 16>}, {transform_indices = @transform_3, window_bounds = array<i64: 8, 16>}]} {
    %c0 = arith.constant 0 : index
    %c0_0 = arith.constant 0 : index
    %0 = vector.load %arg1[%c0, %c0_0] : memref<8x32xf32, #tpu.memory_space<vmem>>, vector<8x32xf32>
    %c0_1 = arith.constant 0 : index
    %c0_2 = arith.constant 0 : index
    %1 = vector.load %arg2[%c0_1, %c0_2] : memref<32x16xf32, #tpu.memory_space<vmem>>, vector<32x16xf32>
    %cst = arith.constant dense<0.000000e+00> : vector<8x16xf32>
    %2 = tpu.matmul %0, %1, %cst {dimension_numbers = #tpu.dot_dimension_numbers<[1], [0], [0], [1], [0, 0, 1, 1], [], []>} : vector<8x32xf32>, vector<32x16xf32>, vector<8x16xf32> -> vector<8x16xf32>
    %c0_3 = arith.constant 0 : index
    %c0_4 = arith.constant 0 : index
    %3 = vector.load %arg3[%c0_3, %c0_4] : memref<1x16xf32, #tpu.memory_space<vmem>>, vector<1x16xf32>
    %4 = vector.broadcast %3 : vector<1x16xf32> to vector<8x16xf32>
    %5 = arith.addf %2, %4 : vector<8x16xf32>
    %cst_5 = arith.constant 0.000000e+00 : f32
    %6 = vector.broadcast %cst_5 : f32 to vector<8x16xf32>
    %7 = arith.maximumf %5, %6 : vector<8x16xf32>
    %cst_6 = arith.constant dense<0xFF800000> : vector<8xf32>
    %8 = vector.multi_reduction <maximumf>, %7, %cst_6 [1] : vector<8x16xf32> to vector<8xf32>
    %9 = vector.shape_cast %8 : vector<8xf32> to vector<8x1xf32>
    %10 = vector.broadcast %9 : vector<8x1xf32> to vector<8x16xf32>
    %11 = arith.subf %7, %10 : vector<8x16xf32>
    %12 = math.exp %11 : vector<8x16xf32>
    %cst_7 = arith.constant dense<0.000000e+00> : vector<8xf32>
    %13 = vector.multi_reduction <add>, %12, %cst_7 [1] : vector<8x16xf32> to vector<8xf32>
    %14 = vector.shape_cast %13 : vector<8xf32> to vector<8x1xf32>
    %15 = tpu.reciprocal %14 {approx = true} : vector<8x1xf32> -> vector<8x1xf32>
    %16 = vector.broadcast %15 : vector<8x1xf32> to vector<8x16xf32>
    %17 = arith.mulf %12, %16 : vector<8x16xf32>
    %c0_8 = arith.constant 0 : index
    %c0_9 = arith.constant 0 : index
    %18 = vector.load %arg4[%c0_8, %c0_9] : memref<8x16xf32, #tpu.memory_space<vmem>>, vector<8x16xf32>
    tpu.vector_store %arg4[%c0_8, %c0_9], %17 {strides = array<i32>} : memref<8x16xf32, #tpu.memory_space<vmem>>, vector<8x16xf32>,
    return
  }
  func.func @transform_0(%arg0: i32) -> (i32, i32) {
    %c0_i32 = arith.constant 0 : i32
    %c0_i32_0 = arith.constant 0 : i32
    return %arg0, %c0_i32 : i32, i32
  }
  func.func @transform_1(%arg0: i32) -> (i32, i32) {
    %c0_i32 = arith.constant 0 : i32
    %c0_i32_0 = arith.constant 0 : i32
    %c0_i32_1 = arith.constant 0 : i32
    return %c0_i32, %c0_i32_0 : i32, i32
  }
  func.func @transform_2(%arg0: i32) -> (i32, i32) {
    %c0_i32 = arith.constant 0 : i32
    %c0_i32_0 = arith.constant 0 : i32
    %c0_i32_1 = arith.constant 0 : i32
    return %c0_i32, %c0_i32_0 : i32, i32
  }
  func.func @transform_3(%arg0: i32) -> (i32, i32) {
    %c0_i32 = arith.constant 0 : i32
    %c0_i32_0 = arith.constant 0 : i32
    return %arg0, %c0_i32 : i32, i32
  }
}

</mosaic_0001>

<llo_original>
// kernel: logistic_regression_forward.1
$region0: #{logistic_regression_forward.1}
  #allocation0 [shape = 'u32[]', space=smem, size = 0x4, offset = 0x4, fixed_abs, tag = 'smem constant byte address 0x4 - core index']
  #allocation1 [shape = 'u32[72,128]{1,0:T(1,128)}', space=vmem, size = 0x9000, scoped, tag = 'internal scratch']
  %s0 = inlined_call_operand.vmem [shape: f32[8,32], index: 0, kind: input, shape index: {}]
  %s1 = inlined_call_operand.vmem [shape: f32[32,16], index: 1, kind: input, shape index: {}]
  %s2 = inlined_call_operand.vmem [shape: f32[1,16], index: 2, kind: input, shape index: {}]
  %s3 = inlined_call_operand.hbm [shape: f32[8,16], index: 3, kind: output, shape index: {}]
  %s4 = sld [smem:[#allocation0]]
  $region22: #{logistic_regression_forward.1} parent=0
    _
  %s6 = ssub.s32 1, %s4
  %s7 = scalar_select 0, %s6, %s4
  $region1: #{logistic_regression_forward.1} parent=0
    #allocation2 [shape = 'u8[4096]{0}', space=vmem, size = 0x1000, scoped, tag = 'output window, operand 0, single buffered']
    #allocation3 [shape = 's32[1]{0}', space=sflag, size = 0x4, scoped, tag = 'scoped memory for logistic_regression_forward.1']
    %8 = vsyncpa [#allocation3], 0
    // Predicated region
    $region2: #{logistic_regression_forward.1} parent=1 // pred_check
      _
    $region3: #{logistic_regression_forward.1} parent=1 // pred_check_branch
      %10 = sbr.rel (0) target = $region5
    $region4: #{logistic_regression_forward.1} parent=1 // pred_region
      _
    $region5: #{logistic_regression_forward.1} parent=1 // pred_fallthru
      _
    // Predicated region
    $region6: #{logistic_regression_forward.1} parent=1 // pred_check
      _
    $region7: #{logistic_regression_forward.1} parent=1 // pred_check_branch
      %12 = sbr.rel (0) target = $region9
    $region8: #{logistic_regression_forward.1} parent=1 // pred_region
      _
    $region9: #{logistic_regression_forward.1} parent=1 // pred_fallthru
      _
    // Predicated region
    $region10: #{logistic_regression_forward.1} parent=1 // pred_check
      _
    $region11: #{logistic_regression_forward.1} parent=1 // pred_check_branch
      %14 = sbr.rel (0) target = $region13
    $region12: #{logistic_regression_forward.1} parent=1 // pred_region
      _
    $region13: #{logistic_regression_forward.1} parent=1 // pred_fallthru
      _
    %v15 = vld [vmem:[%s0] sm:$0xff]
    %v16 = vld [vmem:[%s1] sm:$0xff]
    %v17 = vld [vmem:[%s1 + $0x8] sm:$0xff]
    %v18 = vld [vmem:[%s1 + $0x10] sm:$0xff]
    %v19 = vld [vmem:[%s1 + $0x18] sm:$0xff]
    %v20 = vld [vmem:[%s2] sm:$0x1]
    %v22 = vperm.slane %v20, 0
    %vm24 = vcmask 261120
    %v26 = vsel %vm24, %v15, 0
    %28 = vmatpush.msra.mxu0 0.0
    %29 = vmatpush.msra.mxu0 0.0
    %30 = vmatpush.msra.mxu0 0.0
    %31 = vmatpush.msra.mxu0 0.0
    %32 = vmatpush.msra.mxu0 0.0
    %33 = vmatpush.msra.mxu0 0.0
    %34 = vmatpush.msra.mxu0 0.0
    %35 = vmatpush.msra.mxu0 0.0
    %36 = vmatpush.msra.mxu0 0.0
    %37 = vmatpush.msra.mxu0 0.0
    %38 = vmatpush.msra.mxu0 0.0
    %39 = vmatpush.msra.mxu0 0.0
    %40 = vmatpush.msra.mxu0 %v19
    %41 = vmatpush.msra.mxu0 %v18
    %42 = vmatpush.msra.mxu0 %v17
    %43 = vmatpush.msra.mxu0 %v16
    %44 = vmatmul.f32.gmra.mxu0 %v26
    %v45 = vpop.f32.mrf.mxu0
    %v46 = vadd.f32 %v22, %v45
    %47 = vdwg.mxu0
    %v48 = vmax.f32 %v46, 0.0
    %vm49 = vcmask 130048
    %v50 = vsel %vm49, %v48, -inf
    %51 = vmax.xlane.f32.xlu0 %v50
    %v52 = vpop.xlane.xlu0 %51
    %v53 = vsub.f32 %v48, %v52
    %v54 = vmul.f32 %v53, 1.442695
    %v55 = vpow.pop %v54
    %v56 = vsel %vm49, %v55, 0.0
    %57 = vadd.xlane.f32.xlu0 %v56
    %v58 = vpop.xlane.xlu0 %57
    %v59 = vrcp.pop %v58
    %v60 = vmul.f32 %v55, %v59
    %61 = vst.msk [vmem:[#allocation2] sm:$0xff] %vm49, %v60
    // Predicated region
    $region14: #{logistic_regression_forward.1} parent=1 // pred_check
      _
    $region15: #{logistic_regression_forward.1} parent=1 // pred_check_branch
      %63 = sbr.rel (0) target = $region17
    $region16: #{logistic_regression_forward.1} parent=1 // pred_region
      %65 = vsyncadd [#allocation3], 0
      %s67 = sshll.u32 [#allocation2], 4
      %s68 = int_to_ptr.vmem [resolvable:$true] %s67
      %s69 = sshll.u32 %s3, 4
      %s70 = int_to_ptr.hbm [resolvable:$true] %s69
      %72 = dma.vmem_to_hbm [thread:$0]  %s68, 128, %s70, [#allocation3]
    $region17: #{logistic_regression_forward.1} parent=1 // pred_fallthru
      _
    // Predicated region
    $region18: #{logistic_regression_forward.1} parent=1 // pred_check
      _
    $region19: #{logistic_regression_forward.1} parent=1 // pred_check_branch
      %74 = sbr.rel (0) target = $region21
    $region20: #{logistic_regression_forward.1} parent=1 // pred_region
      %76 = dma.done [#allocation3], 128
    $region21: #{logistic_regression_forward.1} parent=1 // pred_fallthru
      _
    %77 = vsyncpa [#allocation3], 1

</llo_original>
